<compile_context>
chip_gen: v6e
topology: v6e:2x2x1
jax: 0.10.0
libtpu: 0.0.40
codegen_flags: <defaults>
</compile_context>

<pallas_src>
import jax
import jax.numpy as jnp
import numpy as np
from jax import lax
from jax.experimental import pallas as pl
from jax.experimental.pallas import tpu as pltpu

_LANE = 128
_STRIP = 8   # sublanes per strip (1 vreg per [8,128] array) -> ~20 live vregs in the loop

# Offsets into the packed parameter vector (PyTorch [out, in] layout, row-major).
_W1, _B1, _A1 = 0, 21, 28          # w1: 7x3, b1: 7, a1: 7
_W2, _B2, _A2 = 35, 84, 91         # w2: 7x7, b2: 7, a2: 7
_W3, _B3 = 98, 105                 # w3: 1x7 (x0.5), b3: 1 (x0.5)
_NPARAMS = 106
_PACKED_LEN = 128                  # pad to a power-of-two SMEM word count


def _round_up(v, m):
    return ((v + m - 1) // m) * m


def _cdiv(a, b):
    return (a + b - 1) // b


def mlp_kernel(p_ref, x_ref, o_ref):
    """p_ref: SMEM f32[128] packed params (w3/b3 pre-scaled by 0.5 for the tanh sigmoid).
       x_ref: VMEM f32[3, R, 128]  (feature, row-block, lane) -- batch on lanes.
       o_ref: VMEM f32[R, 128]."""
    # Hoist all scalar parameter reads above the strip loop (one SMEM read each; each
    # scalar*vector lowers to a vector-scalar VPU op, no per-strip broadcast_in_dim).
    w1 = [[p_ref[_W1 + 3 * j + k] for k in range(3)] for j in range(7)]
    b1 = [p_ref[_B1 + j] for j in range(7)]
    a1 = [p_ref[_A1 + j] for j in range(7)]
    w2 = [[p_ref[_W2 + 7 * j + k] for k in range(7)] for j in range(7)]
    b2 = [p_ref[_B2 + j] for j in range(7)]
    a2 = [p_ref[_A2 + j] for j in range(7)]
    w3 = [p_ref[_W3 + k] for k in range(7)]
    b3 = p_ref[_B3]

    n_strips = o_ref.shape[0] // _STRIP

    def strip(s, carry):
        r0 = pl.multiple_of(s * _STRIP, _STRIP)
        x0 = x_ref[0, pl.ds(r0, _STRIP), :]           # [8, 128]
        x1 = x_ref[1, pl.ds(r0, _STRIP), :]
        x2 = x_ref[2, pl.ds(r0, _STRIP), :]

        # ---- Linear(3 -> 7) + PReLU(7): unrolled scalar*vector mul-adds ----
        h1 = []
        for j in range(7):
            acc = x0 * w1[j][0] + x1 * w1[j][1] + x2 * w1[j][2] + b1[j]
            h1.append(jnp.where(acc >= 0.0, acc, a1[j] * acc))

        # ---- Linear(7 -> 7) + PReLU(7) ----
        h2 = []
        for j in range(7):
            acc = h1[0] * w2[j][0]
            for k in range(1, 7):
                acc = acc + h1[k] * w2[j][k]
            acc = acc + b2[j]
            h2.append(jnp.where(acc >= 0.0, acc, a2[j] * acc))

        # ---- Linear(7 -> 1) + sigmoid ----
        # sigmoid(t) == 0.5*tanh(t/2) + 0.5 ; the 0.5 scale is folded into w3/b3 in
        # pack_params, so y here is t/2. tanh goes to the EUP (VALU slot is the binding one).
        y = h2[0] * w3[0]
        for k in range(1, 7):
            y = y + h2[k] * w3[k]
        y = y + b3
        o_ref[pl.ds(r0, _STRIP), :] = (0.5 * jnp.tanh(y) + 0.5).astype(o_ref.dtype)
        return carry

    lax.fori_loop(0, n_strips, strip, 0, unroll=min(4, n_strips))


def pack_params(params):
    """Flatten all weights (PyTorch [out, in] layout), biases and PReLU slopes into a single
    1-D f32 block kept in SMEM. w3/b3 are pre-scaled by 0.5 for the tanh-based sigmoid."""
    (w1, b1, a1, w2, b2, a2, w3, b3) = params
    flat = jnp.concatenate([
        w1.reshape(-1), b1.reshape(-1), a1.reshape(-1),
        w2.reshape(-1), b2.reshape(-1), a2.reshape(-1),
        0.5 * w3.reshape(-1), 0.5 * b3.reshape(-1),
    ]).astype(jnp.float32)
    assert flat.shape[0] == _NPARAMS
    return jnp.pad(flat, (0, _PACKED_LEN - _NPARAMS))


def model_t_forward(x, params, *, block_rows=512):
    """x: [N, 3] float32.  Returns sigmoid(MLP(x)): [N, 1] float32."""
    N, F = x.shape
    assert F == 3, "Model_T expects 3 input features"

    rows = _cdiv(N, _LANE)                                 # 128-wide row groups needed
    block_rows = max(_STRIP, (block_rows // _STRIP) * _STRIP)
    if rows > _STRIP:
        # Keep the grid at >= 2 steps so "parallel" can shard across both v7x TensorCores.
        block_rows = min(block_rows, _round_up(_cdiv(rows, 2), _STRIP))
    else:
        block_rows = _round_up(rows, _STRIP)               # tiny batch: a single 8x128 tile
    m_rows = _round_up(rows, block_rows)
    n_pad = m_rows * _LANE
    grid_steps = m_rows // block_rows

    # Layout plumbing (fused inside jit): pad, transpose so batch sits on the lane axis,
    # fold batch into (sublane, lane) so every vreg is fully dense.
    xf = x.astype(jnp.float32)
    if n_pad != N:
        xf = jnp.pad(xf, ((0, n_pad - N), (0, 0)))         # [n_pad, 3]
    xt = xf.T.reshape(3, m_rows, _LANE)                    # [3, M, 128]
    packed = pack_params(params)

    out = pl.pallas_call(
        mlp_kernel,
        out_shape=jax.ShapeDtypeStruct((m_rows, _LANE), jnp.float32),
        grid=(grid_steps,),
        in_specs=[
            # One tiny parameter block, resident in SMEM for the whole kernel.
            pl.BlockSpec(memory_space=pltpu.MemorySpace.SMEM),
            # Input tile: all 3 features x block_rows*128 batch elements.
            pl.BlockSpec((3, block_rows, _LANE), lambda i: (0, i, 0)),
        ],
        # Lane-dense output tile (last dim 128, unmasked stores).
        out_specs=pl.BlockSpec((block_rows, _LANE), lambda i: (i, 0)),
        compiler_params=pltpu.CompilerParams(
            dimension_semantics=("parallel",),
            vmem_limit_bytes=32 * 1024 * 1024,
        ),
    )(packed, xt)

    # Undo the layout plumbing: [M, 128] -> [n_pad] -> [N, 1].
    out_flat = out.reshape(n_pad)
    if n_pad != N:
        out_flat = out_flat[:N]
    return out_flat.reshape(N, 1)


def init_params(key):
    """Deterministic synthetic parameters matching Model_T's shapes.
       Linear weights in PyTorch [out, in] layout; PReLU slopes start at 0.25."""
    k1, k2, k3, k4, k5, k6 = jax.random.split(key, 6)
    w1 = jax.random.normal(k1, (7, 3), jnp.float32) * 0.5
    b1 = jax.random.normal(k2, (7,), jnp.float32) * 0.1
    a1 = jnp.full((7,), 0.25, jnp.float32)
    w2 = jax.random.normal(k3, (7, 7), jnp.float32) * 0.5
    b2 = jax.random.normal(k4, (7,), jnp.float32) * 0.1
    a2 = jnp.full((7,), 0.25, jnp.float32)
    w3 = jax.random.normal(k5, (1, 7), jnp.float32) * 0.5
    b3 = jax.random.normal(k6, (1,), jnp.float32) * 0.1
    return (w1, b1, a1, w2, b2, a2, w3, b3)


def reference_forward(x, params):
    (w1, b1, a1, w2, b2, a2, w3, b3) = params
    h = x @ w1.T + b1
    h = jnp.where(h >= 0, h, a1 * h)
    h = h @ w2.T + b2
    h = jnp.where(h >= 0, h, a2 * h)
    y = h @ w3.T + b3
    return jax.nn.sigmoid(y)


if __name__ == "__main__":
    key = jax.random.PRNGKey(0)
    kx, kp = jax.random.split(key)
    params = init_params(kp)

    fwd = jax.jit(model_t_forward, static_argnames=("block_rows",))

    # Small check (padding path, single grid step) + a slightly larger one that exercises
    # the multi-step grid and the strip loop.
    for n in (16, 2500):
        x = jax.random.normal(jax.random.fold_in(kx, n), (n, 3), jnp.float32)
        out = jax.block_until_ready(fwd(x, params))
        ref = reference_forward(x, params)
        np.testing.assert_allclose(np.asarray(out), np.asarray(ref), rtol=1e-5, atol=1e-5)

    print("KERNEL_OK")
</pallas_src>

<mosaic_0001>
module attributes {stable_mosaic.version = 11 : i64} {
  func.func @mlp_kernel(%arg0: i32, %arg1: memref<128xf32, #tpu.memory_space<smem>>, %arg2: memref<3x8x128xf32, #tpu.memory_space<vmem>>, %arg3: memref<8x128xf32, #tpu.memory_space<vmem>>) attributes {dimension_semantics = [#tpu.dimension_semantics<parallel>], iteration_bounds = array<i64: 1>, scalar_prefetch = 0 : i64, scratch_operands = 0 : i64, tpu.core_type = #tpu.core_type<tc>, window_params = [{transform_indices = @transform_0, window_bounds = array<i64: 128>}, {transform_indices = @transform_1, window_bounds = array<i64: 3, 8, 128>}, {transform_indices = @transform_2, window_bounds = array<i64: 8, 128>}]} {
    %c0 = arith.constant 0 : index
    %0 = memref.load %arg1[%c0] : memref<128xf32, #tpu.memory_space<smem>>
    %c1 = arith.constant 1 : index
    %1 = memref.load %arg1[%c1] : memref<128xf32, #tpu.memory_space<smem>>
    %c2 = arith.constant 2 : index
    %2 = memref.load %arg1[%c2] : memref<128xf32, #tpu.memory_space<smem>>
    %c3 = arith.constant 3 : index
    %3 = memref.load %arg1[%c3] : memref<128xf32, #tpu.memory_space<smem>>
    %c4 = arith.constant 4 : index
    %4 = memref.load %arg1[%c4] : memref<128xf32, #tpu.memory_space<smem>>
    %c5 = arith.constant 5 : index
    %5 = memref.load %arg1[%c5] : memref<128xf32, #tpu.memory_space<smem>>
    %c6 = arith.constant 6 : index
    %6 = memref.load %arg1[%c6] : memref<128xf32, #tpu.memory_space<smem>>
    %c7 = arith.constant 7 : index
    %7 = memref.load %arg1[%c7] : memref<128xf32, #tpu.memory_space<smem>>
    %c8 = arith.constant 8 : index
    %8 = memref.load %arg1[%c8] : memref<128xf32, #tpu.memory_space<smem>>
    %c9 = arith.constant 9 : index
    %9 = memref.load %arg1[%c9] : memref<128xf32, #tpu.memory_space<smem>>
    %c10 = arith.constant 10 : index
    %10 = memref.load %arg1[%c10] : memref<128xf32, #tpu.memory_space<smem>>
    %c11 = arith.constant 11 : index
    %11 = memref.load %arg1[%c11] : memref<128xf32, #tpu.memory_space<smem>>
    %c12 = arith.constant 12 : index
    %12 = memref.load %arg1[%c12] : memref<128xf32, #tpu.memory_space<smem>>
    %c13 = arith.constant 13 : index
    %13 = memref.load %arg1[%c13] : memref<128xf32, #tpu.memory_space<smem>>
    %c14 = arith.constant 14 : index
    %14 = memref.load %arg1[%c14] : memref<128xf32, #tpu.memory_space<smem>>
    %c15 = arith.constant 15 : index
    %15 = memref.load %arg1[%c15] : memref<128xf32, #tpu.memory_space<smem>>
    %c16 = arith.constant 16 : index
    %16 = memref.load %arg1[%c16] : memref<128xf32, #tpu.memory_space<smem>>
    %c17 = arith.constant 17 : index
    %17 = memref.load %arg1[%c17] : memref<128xf32, #tpu.memory_space<smem>>
    %c18 = arith.constant 18 : index
    %18 = memref.load %arg1[%c18] : memref<128xf32, #tpu.memory_space<smem>>
    %c19 = arith.constant 19 : index
    %19 = memref.load %arg1[%c19] : memref<128xf32, #tpu.memory_space<smem>>
    %c20 = arith.constant 20 : index
    %20 = memref.load %arg1[%c20] : memref<128xf32, #tpu.memory_space<smem>>
    %c21 = arith.constant 21 : index
    %21 = memref.load %arg1[%c21] : memref<128xf32, #tpu.memory_space<smem>>
    %c22 = arith.constant 22 : index
    %22 = memref.load %arg1[%c22] : memref<128xf32, #tpu.memory_space<smem>>
    %c23 = arith.constant 23 : index
    %23 = memref.load %arg1[%c23] : memref<128xf32, #tpu.memory_space<smem>>
    %c24 = arith.constant 24 : index
    %24 = memref.load %arg1[%c24] : memref<128xf32, #tpu.memory_space<smem>>
    %c25 = arith.constant 25 : index
    %25 = memref.load %arg1[%c25] : memref<128xf32, #tpu.memory_space<smem>>
    %c26 = arith.constant 26 : index
    %26 = memref.load %arg1[%c26] : memref<128xf32, #tpu.memory_space<smem>>
    %c27 = arith.constant 27 : index
    %27 = memref.load %arg1[%c27] : memref<128xf32, #tpu.memory_space<smem>>
    %c28 = arith.constant 28 : index
    %28 = memref.load %arg1[%c28] : memref<128xf32, #tpu.memory_space<smem>>
    %c29 = arith.constant 29 : index
    %29 = memref.load %arg1[%c29] : memref<128xf32, #tpu.memory_space<smem>>
    %c30 = arith.constant 30 : index
    %30 = memref.load %arg1[%c30] : memref<128xf32, #tpu.memory_space<smem>>
    %c31 = arith.constant 31 : index
    %31 = memref.load %arg1[%c31] : memref<128xf32, #tpu.memory_space<smem>>
    %c32 = arith.constant 32 : index
    %32 = memref.load %arg1[%c32] : memref<128xf32, #tpu.memory_space<smem>>
    %c33 = arith.constant 33 : index
    %33 = memref.load %arg1[%c33] : memref<128xf32, #tpu.memory_space<smem>>
    %c34 = arith.constant 34 : index
    %34 = memref.load %arg1[%c34] : memref<128xf32, #tpu.memory_space<smem>>
    %c35 = arith.constant 35 : index
    %35 = memref.load %arg1[%c35] : memref<128xf32, #tpu.memory_space<smem>>
    %c36 = arith.constant 36 : index
    %36 = memref.load %arg1[%c36] : memref<128xf32, #tpu.memory_space<smem>>
    %c37 = arith.constant 37 : index
    %37 = memref.load %arg1[%c37] : memref<128xf32, #tpu.memory_space<smem>>
    %c38 = arith.constant 38 : index
    %38 = memref.load %arg1[%c38] : memref<128xf32, #tpu.memory_space<smem>>
    %c39 = arith.constant 39 : index
    %39 = memref.load %arg1[%c39] : memref<128xf32, #tpu.memory_space<smem>>
    %c40 = arith.constant 40 : index
    %40 = memref.load %arg1[%c40] : memref<128xf32, #tpu.memory_space<smem>>
    %c41 = arith.constant 41 : index
    %41 = memref.load %arg1[%c41] : memref<128xf32, #tpu.memory_space<smem>>
    %c42 = arith.constant 42 : index
    %42 = memref.load %arg1[%c42] : memref<128xf32, #tpu.memory_space<smem>>
    %c43 = arith.constant 43 : index
    %43 = memref.load %arg1[%c43] : memref<128xf32, #tpu.memory_space<smem>>
    %c44 = arith.constant 44 : index
    %44 = memref.load %arg1[%c44] : memref<128xf32, #tpu.memory_space<smem>>
    %c45 = arith.constant 45 : index
    %45 = memref.load %arg1[%c45] : memref<128xf32, #tpu.memory_space<smem>>
    %c46 = arith.constant 46 : index
    %46 = memref.load %arg1[%c46] : memref<128xf32, #tpu.memory_space<smem>>
    %c47 = arith.constant 47 : index
    %47 = memref.load %arg1[%c47] : memref<128xf32, #tpu.memory_space<smem>>
    %c48 = arith.constant 48 : index
    %48 = memref.load %arg1[%c48] : memref<128xf32, #tpu.memory_space<smem>>
    %c49 = arith.constant 49 : index
    %49 = memref.load %arg1[%c49] : memref<128xf32, #tpu.memory_space<smem>>
    %c50 = arith.constant 50 : index
    %50 = memref.load %arg1[%c50] : memref<128xf32, #tpu.memory_space<smem>>
    %c51 = arith.constant 51 : index
    %51 = memref.load %arg1[%c51] : memref<128xf32, #tpu.memory_space<smem>>
    %c52 = arith.constant 52 : index
    %52 = memref.load %arg1[%c52] : memref<128xf32, #tpu.memory_space<smem>>
    %c53 = arith.constant 53 : index
    %53 = memref.load %arg1[%c53] : memref<128xf32, #tpu.memory_space<smem>>
    %c54 = arith.constant 54 : index
    %54 = memref.load %arg1[%c54] : memref<128xf32, #tpu.memory_space<smem>>
    %c55 = arith.constant 55 : index
    %55 = memref.load %arg1[%c55] : memref<128xf32, #tpu.memory_space<smem>>
    %c56 = arith.constant 56 : index
    %56 = memref.load %arg1[%c56] : memref<128xf32, #tpu.memory_space<smem>>
    %c57 = arith.constant 57 : index
    %57 = memref.load %arg1[%c57] : memref<128xf32, #tpu.memory_space<smem>>
    %c58 = arith.constant 58 : index
    %58 = memref.load %arg1[%c58] : memref<128xf32, #tpu.memory_space<smem>>
    %c59 = arith.constant 59 : index
    %59 = memref.load %arg1[%c59] : memref<128xf32, #tpu.memory_space<smem>>
    %c60 = arith.constant 60 : index
    %60 = memref.load %arg1[%c60] : memref<128xf32, #tpu.memory_space<smem>>
    %c61 = arith.constant 61 : index
    %61 = memref.load %arg1[%c61] : memref<128xf32, #tpu.memory_space<smem>>
    %c62 = arith.constant 62 : index
    %62 = memref.load %arg1[%c62] : memref<128xf32, #tpu.memory_space<smem>>
    %c63 = arith.constant 63 : index
    %63 = memref.load %arg1[%c63] : memref<128xf32, #tpu.memory_space<smem>>
    %c64 = arith.constant 64 : index
    %64 = memref.load %arg1[%c64] : memref<128xf32, #tpu.memory_space<smem>>
    %c65 = arith.constant 65 : index
    %65 = memref.load %arg1[%c65] : memref<128xf32, #tpu.memory_space<smem>>
    %c66 = arith.constant 66 : index
    %66 = memref.load %arg1[%c66] : memref<128xf32, #tpu.memory_space<smem>>
    %c67 = arith.constant 67 : index
    %67 = memref.load %arg1[%c67] : memref<128xf32, #tpu.memory_space<smem>>
    %c68 = arith.constant 68 : index
    %68 = memref.load %arg1[%c68] : memref<128xf32, #tpu.memory_space<smem>>
    %c69 = arith.constant 69 : index
    %69 = memref.load %arg1[%c69] : memref<128xf32, #tpu.memory_space<smem>>
    %c70 = arith.constant 70 : index
    %70 = memref.load %arg1[%c70] : memref<128xf32, #tpu.memory_space<smem>>
    %c71 = arith.constant 71 : index
    %71 = memref.load %arg1[%c71] : memref<128xf32, #tpu.memory_space<smem>>
    %c72 = arith.constant 72 : index
    %72 = memref.load %arg1[%c72] : memref<128xf32, #tpu.memory_space<smem>>
    %c73 = arith.constant 73 : index
    %73 = memref.load %arg1[%c73] : memref<128xf32, #tpu.memory_space<smem>>
    %c74 = arith.constant 74 : index
    %74 = memref.load %arg1[%c74] : memref<128xf32, #tpu.memory_space<smem>>
    %c75 = arith.constant 75 : index
    %75 = memref.load %arg1[%c75] : memref<128xf32, #tpu.memory_space<smem>>
    %c76 = arith.constant 76 : index
    %76 = memref.load %arg1[%c76] : memref<128xf32, #tpu.memory_space<smem>>
    %c77 = arith.constant 77 : index
    %77 = memref.load %arg1[%c77] : memref<128xf32, #tpu.memory_space<smem>>
    %c78 = arith.constant 78 : index
    %78 = memref.load %arg1[%c78] : memref<128xf32, #tpu.memory_space<smem>>
    %c79 = arith.constant 79 : index
    %79 = memref.load %arg1[%c79] : memref<128xf32, #tpu.memory_space<smem>>
    %c80 = arith.constant 80 : index
    %80 = memref.load %arg1[%c80] : memref<128xf32, #tpu.memory_space<smem>>
    %c81 = arith.constant 81 : index
    %81 = memref.load %arg1[%c81] : memref<128xf32, #tpu.memory_space<smem>>
    %c82 = arith.constant 82 : index
    %82 = memref.load %arg1[%c82] : memref<128xf32, #tpu.memory_space<smem>>
    %c83 = arith.constant 83 : index
    %83 = memref.load %arg1[%c83] : memref<128xf32, #tpu.memory_space<smem>>
    %c84 = arith.constant 84 : index
    %84 = memref.load %arg1[%c84] : memref<128xf32, #tpu.memory_space<smem>>
    %c85 = arith.constant 85 : index
    %85 = memref.load %arg1[%c85] : memref<128xf32, #tpu.memory_space<smem>>
    %c86 = arith.constant 86 : index
    %86 = memref.load %arg1[%c86] : memref<128xf32, #tpu.memory_space<smem>>
    %c87 = arith.constant 87 : index
    %87 = memref.load %arg1[%c87] : memref<128xf32, #tpu.memory_space<smem>>
    %c88 = arith.constant 88 : index
    %88 = memref.load %arg1[%c88] : memref<128xf32, #tpu.memory_space<smem>>
    %c89 = arith.constant 89 : index
    %89 = memref.load %arg1[%c89] : memref<128xf32, #tpu.memory_space<smem>>
    %c90 = arith.constant 90 : index
    %90 = memref.load %arg1[%c90] : memref<128xf32, #tpu.memory_space<smem>>
    %c91 = arith.constant 91 : index
    %91 = memref.load %arg1[%c91] : memref<128xf32, #tpu.memory_space<smem>>
    %c92 = arith.constant 92 : index
    %92 = memref.load %arg1[%c92] : memref<128xf32, #tpu.memory_space<smem>>
    %c93 = arith.constant 93 : index
    %93 = memref.load %arg1[%c93] : memref<128xf32, #tpu.memory_space<smem>>
    %c94 = arith.constant 94 : index
    %94 = memref.load %arg1[%c94] : memref<128xf32, #tpu.memory_space<smem>>
    %c95 = arith.constant 95 : index
    %95 = memref.load %arg1[%c95] : memref<128xf32, #tpu.memory_space<smem>>
    %c96 = arith.constant 96 : index
    %96 = memref.load %arg1[%c96] : memref<128xf32, #tpu.memory_space<smem>>
    %c97 = arith.constant 97 : index
    %97 = memref.load %arg1[%c97] : memref<128xf32, #tpu.memory_space<smem>>
    %c98 = arith.constant 98 : index
    %98 = memref.load %arg1[%c98] : memref<128xf32, #tpu.memory_space<smem>>
    %c99 = arith.constant 99 : index
    %99 = memref.load %arg1[%c99] : memref<128xf32, #tpu.memory_space<smem>>
    %c100 = arith.constant 100 : index
    %100 = memref.load %arg1[%c100] : memref<128xf32, #tpu.memory_space<smem>>
    %c101 = arith.constant 101 : index
    %101 = memref.load %arg1[%c101] : memref<128xf32, #tpu.memory_space<smem>>
    %c102 = arith.constant 102 : index
    %102 = memref.load %arg1[%c102] : memref<128xf32, #tpu.memory_space<smem>>
    %c103 = arith.constant 103 : index
    %103 = memref.load %arg1[%c103] : memref<128xf32, #tpu.memory_space<smem>>
    %c104 = arith.constant 104 : index
    %104 = memref.load %arg1[%c104] : memref<128xf32, #tpu.memory_space<smem>>
    %c105 = arith.constant 105 : index
    %105 = memref.load %arg1[%c105] : memref<128xf32, #tpu.memory_space<smem>>
    %c0_i32 = arith.constant 0 : i32
    %c8_i32 = arith.constant 8 : i32
    %106 = arith.muli %c0_i32, %c8_i32 : i32
    %107 = tpu.assume_multiple %106, 8 : i32
    %c0_0 = arith.constant 0 : index
    %108 = arith.index_cast %107 : i32 to index
    %c0_1 = arith.constant 0 : index
    %109 = vector.load %arg2[%c0_0, %108, %c0_1] : memref<3x8x128xf32, #tpu.memory_space<vmem>>, vector<1x8x128xf32>
    %110 = vector.shape_cast %109 : vector<1x8x128xf32> to vector<8x128xf32>
    %c1_2 = arith.constant 1 : index
    %111 = arith.index_cast %107 : i32 to index
    %c0_3 = arith.constant 0 : index
    %112 = vector.load %arg2[%c1_2, %111, %c0_3] : memref<3x8x128xf32, #tpu.memory_space<vmem>>, vector<1x8x128xf32>
    %113 = vector.shape_cast %112 : vector<1x8x128xf32> to vector<8x128xf32>
    %c2_4 = arith.constant 2 : index
    %114 = arith.index_cast %107 : i32 to index
    %c0_5 = arith.constant 0 : index
    %115 = vector.load %arg2[%c2_4, %114, %c0_5] : memref<3x8x128xf32, #tpu.memory_space<vmem>>, vector<1x8x128xf32>
    %116 = vector.shape_cast %115 : vector<1x8x128xf32> to vector<8x128xf32>
    %117 = vector.broadcast %0 : f32 to vector<8x128xf32>
    %118 = arith.mulf %110, %117 : vector<8x128xf32>
    %119 = vector.broadcast %1 : f32 to vector<8x128xf32>
    %120 = arith.mulf %113, %119 : vector<8x128xf32>
    %121 = arith.addf %118, %120 : vector<8x128xf32>
    %122 = vector.broadcast %2 : f32 to vector<8x128xf32>
    %123 = arith.mulf %116, %122 : vector<8x128xf32>
    %124 = arith.addf %121, %123 : vector<8x128xf32>
    %125 = vector.broadcast %21 : f32 to vector<8x128xf32>
    %126 = arith.addf %124, %125 : vector<8x128xf32>
    %cst = arith.constant 0.000000e+00 : f32
    %127 = vector.broadcast %cst : f32 to vector<8x128xf32>
    %128 = arith.cmpf oge, %126, %127 : vector<8x128xf32>
    %129 = vector.broadcast %28 : f32 to vector<8x128xf32>
    %130 = arith.mulf %129, %126 : vector<8x128xf32>
    %131 = arith.select %128, %126, %130 : vector<8x128xi1>, vector<8x128xf32>
    %132 = vector.broadcast %3 : f32 to vector<8x128xf32>
    %133 = arith.mulf %110, %132 : vector<8x128xf32>
    %134 = vector.broadcast %4 : f32 to vector<8x128xf32>
    %135 = arith.mulf %113, %134 : vector<8x128xf32>
    %136 = arith.addf %133, %135 : vector<8x128xf32>
    %137 = vector.broadcast %5 : f32 to vector<8x128xf32>
    %138 = arith.mulf %116, %137 : vector<8x128xf32>
    %139 = arith.addf %136, %138 : vector<8x128xf32>
    %140 = vector.broadcast %22 : f32 to vector<8x128xf32>
    %141 = arith.addf %139, %140 : vector<8x128xf32>
    %cst_6 = arith.constant 0.000000e+00 : f32
    %142 = vector.broadcast %cst_6 : f32 to vector<8x128xf32>
    %143 = arith.cmpf oge, %141, %142 : vector<8x128xf32>
    %144 = vector.broadcast %29 : f32 to vector<8x128xf32>
    %145 = arith.mulf %144, %141 : vector<8x128xf32>
    %146 = arith.select %143, %141, %145 : vector<8x128xi1>, vector<8x128xf32>
    %147 = vector.broadcast %6 : f32 to vector<8x128xf32>
    %148 = arith.mulf %110, %147 : vector<8x128xf32>
    %149 = vector.broadcast %7 : f32 to vector<8x128xf32>
    %150 = arith.mulf %113, %149 : vector<8x128xf32>
    %151 = arith.addf %148, %150 : vector<8x128xf32>
    %152 = vector.broadcast %8 : f32 to vector<8x128xf32>
    %153 = arith.mulf %116, %152 : vector<8x128xf32>
    %154 = arith.addf %151, %153 : vector<8x128xf32>
    %155 = vector.broadcast %23 : f32 to vector<8x128xf32>
    %156 = arith.addf %154, %155 : vector<8x128xf32>
    %cst_7 = arith.constant 0.000000e+00 : f32
    %157 = vector.broadcast %cst_7 : f32 to vector<8x128xf32>
    %158 = arith.cmpf oge, %156, %157 : vector<8x128xf32>
    %159 = vector.broadcast %30 : f32 to vector<8x128xf32>
    %160 = arith.mulf %159, %156 : vector<8x128xf32>
    %161 = arith.select %158, %156, %160 : vector<8x128xi1>, vector<8x128xf32>
    %162 = vector.broadcast %9 : f32 to vector<8x128xf32>
    %163 = arith.mulf %110, %162 : vector<8x128xf32>
    %164 = vector.broadcast %10 : f32 to vector<8x128xf32>
    %165 = arith.mulf %113, %164 : vector<8x128xf32>
    %166 = arith.addf %163, %165 : vector<8x128xf32>
    %167 = vector.broadcast %11 : f32 to vector<8x128xf32>
    %168 = arith.mulf %116, %167 : vector<8x128xf32>
    %169 = arith.addf %166, %168 : vector<8x128xf32>
    %170 = vector.broadcast %24 : f32 to vector<8x128xf32>
    %171 = arith.addf %169, %170 : vector<8x128xf32>
    %cst_8 = arith.constant 0.000000e+00 : f32
    %172 = vector.broadcast %cst_8 : f32 to vector<8x128xf32>
    %173 = arith.cmpf oge, %171, %172 : vector<8x128xf32>
    %174 = vector.broadcast %31 : f32 to vector<8x128xf32>
    %175 = arith.mulf %174, %171 : vector<8x128xf32>
    %176 = arith.select %173, %171, %175 : vector<8x128xi1>, vector<8x128xf32>
    %177 = vector.broadcast %12 : f32 to vector<8x128xf32>
    %178 = arith.mulf %110, %177 : vector<8x128xf32>
    %179 = vector.broadcast %13 : f32 to vector<8x128xf32>
    %180 = arith.mulf %113, %179 : vector<8x128xf32>
    %181 = arith.addf %178, %180 : vector<8x128xf32>
    %182 = vector.broadcast %14 : f32 to vector<8x128xf32>
    %183 = arith.mulf %116, %182 : vector<8x128xf32>
    %184 = arith.addf %181, %183 : vector<8x128xf32>
    %185 = vector.broadcast %25 : f32 to vector<8x128xf32>
    %186 = arith.addf %184, %185 : vector<8x128xf32>
    %cst_9 = arith.constant 0.000000e+00 : f32
    %187 = vector.broadcast %cst_9 : f32 to vector<8x128xf32>
    %188 = arith.cmpf oge, %186, %187 : vector<8x128xf32>
    %189 = vector.broadcast %32 : f32 to vector<8x128xf32>
    %190 = arith.mulf %189, %186 : vector<8x128xf32>
    %191 = arith.select %188, %186, %190 : vector<8x128xi1>, vector<8x128xf32>
    %192 = vector.broadcast %15 : f32 to vector<8x128xf32>
    %193 = arith.mulf %110, %192 : vector<8x128xf32>
    %194 = vector.broadcast %16 : f32 to vector<8x128xf32>
    %195 = arith.mulf %113, %194 : vector<8x128xf32>
    %196 = arith.addf %193, %195 : vector<8x128xf32>
    %197 = vector.broadcast %17 : f32 to vector<8x128xf32>
    %198 = arith.mulf %116, %197 : vector<8x128xf32>
    %199 = arith.addf %196, %198 : vector<8x128xf32>
    %200 = vector.broadcast %26 : f32 to vector<8x128xf32>
    %201 = arith.addf %199, %200 : vector<8x128xf32>
    %cst_10 = arith.constant 0.000000e+00 : f32
    %202 = vector.broadcast %cst_10 : f32 to vector<8x128xf32>
    %203 = arith.cmpf oge, %201, %202 : vector<8x128xf32>
    %204 = vector.broadcast %33 : f32 to vector<8x128xf32>
    %205 = arith.mulf %204, %201 : vector<8x128xf32>
    %206 = arith.select %203, %201, %205 : vector<8x128xi1>, vector<8x128xf32>
    %207 = vector.broadcast %18 : f32 to vector<8x128xf32>
    %208 = arith.mulf %110, %207 : vector<8x128xf32>
    %209 = vector.broadcast %19 : f32 to vector<8x128xf32>
    %210 = arith.mulf %113, %209 : vector<8x128xf32>
    %211 = arith.addf %208, %210 : vector<8x128xf32>
    %212 = vector.broadcast %20 : f32 to vector<8x128xf32>
    %213 = arith.mulf %116, %212 : vector<8x128xf32>
    %214 = arith.addf %211, %213 : vector<8x128xf32>
    %215 = vector.broadcast %27 : f32 to vector<8x128xf32>
    %216 = arith.addf %214, %215 : vector<8x128xf32>
    %cst_11 = arith.constant 0.000000e+00 : f32
    %217 = vector.broadcast %cst_11 : f32 to vector<8x128xf32>
    %218 = arith.cmpf oge, %216, %217 : vector<8x128xf32>
    %219 = vector.broadcast %34 : f32 to vector<8x128xf32>
    %220 = arith.mulf %219, %216 : vector<8x128xf32>
    %221 = arith.select %218, %216, %220 : vector<8x128xi1>, vector<8x128xf32>
    %222 = vector.broadcast %35 : f32 to vector<8x128xf32>
    %223 = arith.mulf %131, %222 : vector<8x128xf32>
    %224 = vector.broadcast %36 : f32 to vector<8x128xf32>
    %225 = arith.mulf %146, %224 : vector<8x128xf32>
    %226 = arith.addf %223, %225 : vector<8x128xf32>
    %227 = vector.broadcast %37 : f32 to vector<8x128xf32>
    %228 = arith.mulf %161, %227 : vector<8x128xf32>
    %229 = arith.addf %226, %228 : vector<8x128xf32>
    %230 = vector.broadcast %38 : f32 to vector<8x128xf32>
    %231 = arith.mulf %176, %230 : vector<8x128xf32>
    %232 = arith.addf %229, %231 : vector<8x128xf32>
    %233 = vector.broadcast %39 : f32 to vector<8x128xf32>
    %234 = arith.mulf %191, %233 : vector<8x128xf32>
    %235 = arith.addf %232, %234 : vector<8x128xf32>
    %236 = vector.broadcast %40 : f32 to vector<8x128xf32>
    %237 = arith.mulf %206, %236 : vector<8x128xf32>
    %238 = arith.addf %235, %237 : vector<8x128xf32>
    %239 = vector.broadcast %41 : f32 to vector<8x128xf32>
    %240 = arith.mulf %221, %239 : vector<8x128xf32>
    %241 = arith.addf %238, %240 : vector<8x128xf32>
    %242 = vector.broadcast %84 : f32 to vector<8x128xf32>
    %243 = arith.addf %241, %242 : vector<8x128xf32>
    %cst_12 = arith.constant 0.000000e+00 : f32
    %244 = vector.broadcast %cst_12 : f32 to vector<8x128xf32>
    %245 = arith.cmpf oge, %243, %244 : vector<8x128xf32>
    %246 = vector.broadcast %91 : f32 to vector<8x128xf32>
    %247 = arith.mulf %246, %243 : vector<8x128xf32>
    %248 = arith.select %245, %243, %247 : vector<8x128xi1>, vector<8x128xf32>
    %249 = vector.broadcast %42 : f32 to vector<8x128xf32>
    %250 = arith.mulf %131, %249 : vector<8x128xf32>
    %251 = vector.broadcast %43 : f32 to vector<8x128xf32>
    %252 = arith.mulf %146, %251 : vector<8x128xf32>
    %253 = arith.addf %250, %252 : vector<8x128xf32>
    %254 = vector.broadcast %44 : f32 to vector<8x128xf32>
    %255 = arith.mulf %161, %254 : vector<8x128xf32>
    %256 = arith.addf %253, %255 : vector<8x128xf32>
    %257 = vector.broadcast %45 : f32 to vector<8x128xf32>
    %258 = arith.mulf %176, %257 : vector<8x128xf32>
    %259 = arith.addf %256, %258 : vector<8x128xf32>
    %260 = vector.broadcast %46 : f32 to vector<8x128xf32>
    %261 = arith.mulf %191, %260 : vector<8x128xf32>
    %262 = arith.addf %259, %261 : vector<8x128xf32>
    %263 = vector.broadcast %47 : f32 to vector<8x128xf32>
    %264 = arith.mulf %206, %263 : vector<8x128xf32>
    %265 = arith.addf %262, %264 : vector<8x128xf32>
    %266 = vector.broadcast %48 : f32 to vector<8x128xf32>
    %267 = arith.mulf %221, %266 : vector<8x128xf32>
    %268 = arith.addf %265, %267 : vector<8x128xf32>
    %269 = vector.broadcast %85 : f32 to vector<8x128xf32>
    %270 = arith.addf %268, %269 : vector<8x128xf32>
    %cst_13 = arith.constant 0.000000e+00 : f32
    %271 = vector.broadcast %cst_13 : f32 to vector<8x128xf32>
    %272 = arith.cmpf oge, %270, %271 : vector<8x128xf32>
    %273 = vector.broadcast %92 : f32 to vector<8x128xf32>
    %274 = arith.mulf %273, %270 : vector<8x128xf32>
    %275 = arith.select %272, %270, %274 : vector<8x128xi1>, vector<8x128xf32>
    %276 = vector.broadcast %49 : f32 to vector<8x128xf32>
    %277 = arith.mulf %131, %276 : vector<8x128xf32>
    %278 = vector.broadcast %50 : f32 to vector<8x128xf32>
    %279 = arith.mulf %146, %278 : vector<8x128xf32>
    %280 = arith.addf %277, %279 : vector<8x128xf32>
    %281 = vector.broadcast %51 : f32 to vector<8x128xf32>
    %282 = arith.mulf %161, %281 : vector<8x128xf32>
    %283 = arith.addf %280, %282 : vector<8x128xf32>
    %284 = vector.broadcast %52 : f32 to vector<8x128xf32>
    %285 = arith.mulf %176, %284 : vector<8x128xf32>
    %286 = arith.addf %283, %285 : vector<8x128xf32>
    %287 = vector.broadcast %53 : f32 to vector<8x128xf32>
    %288 = arith.mulf %191, %287 : vector<8x128xf32>
    %289 = arith.addf %286, %288 : vector<8x128xf32>
    %290 = vector.broadcast %54 : f32 to vector<8x128xf32>
    %291 = arith.mulf %206, %290 : vector<8x128xf32>
    %292 = arith.addf %289, %291 : vector<8x128xf32>
    %293 = vector.broadcast %55 : f32 to vector<8x128xf32>
    %294 = arith.mulf %221, %293 : vector<8x128xf32>
    %295 = arith.addf %292, %294 : vector<8x128xf32>
    %296 = vector.broadcast %86 : f32 to vector<8x128xf32>
    %297 = arith.addf %295, %296 : vector<8x128xf32>
    %cst_14 = arith.constant 0.000000e+00 : f32
    %298 = vector.broadcast %cst_14 : f32 to vector<8x128xf32>
    %299 = arith.cmpf oge, %297, %298 : vector<8x128xf32>
    %300 = vector.broadcast %93 : f32 to vector<8x128xf32>
    %301 = arith.mulf %300, %297 : vector<8x128xf32>
    %302 = arith.select %299, %297, %301 : vector<8x128xi1>, vector<8x128xf32>
    %303 = vector.broadcast %56 : f32 to vector<8x128xf32>
    %304 = arith.mulf %131, %303 : vector<8x128xf32>
    %305 = vector.broadcast %57 : f32 to vector<8x128xf32>
    %306 = arith.mulf %146, %305 : vector<8x128xf32>
    %307 = arith.addf %304, %306 : vector<8x128xf32>
    %308 = vector.broadcast %58 : f32 to vector<8x128xf32>
    %309 = arith.mulf %161, %308 : vector<8x128xf32>
    %310 = arith.addf %307, %309 : vector<8x128xf32>
    %311 = vector.broadcast %59 : f32 to vector<8x128xf32>
    %312 = arith.mulf %176, %311 : vector<8x128xf32>
    %313 = arith.addf %310, %312 : vector<8x128xf32>
    %314 = vector.broadcast %60 : f32 to vector<8x128xf32>
    %315 = arith.mulf %191, %314 : vector<8x128xf32>
    %316 = arith.addf %313, %315 : vector<8x128xf32>
    %317 = vector.broadcast %61 : f32 to vector<8x128xf32>
    %318 = arith.mulf %206, %317 : vector<8x128xf32>
    %319 = arith.addf %316, %318 : vector<8x128xf32>
    %320 = vector.broadcast %62 : f32 to vector<8x128xf32>
    %321 = arith.mulf %221, %320 : vector<8x128xf32>
    %322 = arith.addf %319, %321 : vector<8x128xf32>
    %323 = vector.broadcast %87 : f32 to vector<8x128xf32>
    %324 = arith.addf %322, %323 : vector<8x128xf32>
    %cst_15 = arith.constant 0.000000e+00 : f32
    %325 = vector.broadcast %cst_15 : f32 to vector<8x128xf32>
    %326 = arith.cmpf oge, %324, %325 : vector<8x128xf32>
    %327 = vector.broadcast %94 : f32 to vector<8x128xf32>
    %328 = arith.mulf %327, %324 : vector<8x128xf32>
    %329 = arith.select %326, %324, %328 : vector<8x128xi1>, vector<8x128xf32>
    %330 = vector.broadcast %63 : f32 to vector<8x128xf32>
    %331 = arith.mulf %131, %330 : vector<8x128xf32>
    %332 = vector.broadcast %64 : f32 to vector<8x128xf32>
    %333 = arith.mulf %146, %332 : vector<8x128xf32>
    %334 = arith.addf %331, %333 : vector<8x128xf32>
    %335 = vector.broadcast %65 : f32 to vector<8x128xf32>
    %336 = arith.mulf %161, %335 : vector<8x128xf32>
    %337 = arith.addf %334, %336 : vector<8x128xf32>
    %338 = vector.broadcast %66 : f32 to vector<8x128xf32>
    %339 = arith.mulf %176, %338 : vector<8x128xf32>
    %340 = arith.addf %337, %339 : vector<8x128xf32>
    %341 = vector.broadcast %67 : f32 to vector<8x128xf32>
    %342 = arith.mulf %191, %341 : vector<8x128xf32>
    %343 = arith.addf %340, %342 : vector<8x128xf32>
    %344 = vector.broadcast %68 : f32 to vector<8x128xf32>
    %345 = arith.mulf %206, %344 : vector<8x128xf32>
    %346 = arith.addf %343, %345 : vector<8x128xf32>
    %347 = vector.broadcast %69 : f32 to vector<8x128xf32>
    %348 = arith.mulf %221, %347 : vector<8x128xf32>
    %349 = arith.addf %346, %348 : vector<8x128xf32>
    %350 = vector.broadcast %88 : f32 to vector<8x128xf32>
    %351 = arith.addf %349, %350 : vector<8x128xf32>
    %cst_16 = arith.constant 0.000000e+00 : f32
    %352 = vector.broadcast %cst_16 : f32 to vector<8x128xf32>
    %353 = arith.cmpf oge, %351, %352 : vector<8x128xf32>
    %354 = vector.broadcast %95 : f32 to vector<8x128xf32>
    %355 = arith.mulf %354, %351 : vector<8x128xf32>
    %356 = arith.select %353, %351, %355 : vector<8x128xi1>, vector<8x128xf32>
    %357 = vector.broadcast %70 : f32 to vector<8x128xf32>
    %358 = arith.mulf %131, %357 : vector<8x128xf32>
    %359 = vector.broadcast %71 : f32 to vector<8x128xf32>
    %360 = arith.mulf %146, %359 : vector<8x128xf32>
    %361 = arith.addf %358, %360 : vector<8x128xf32>
    %362 = vector.broadcast %72 : f32 to vector<8x128xf32>
    %363 = arith.mulf %161, %362 : vector<8x128xf32>
    %364 = arith.addf %361, %363 : vector<8x128xf32>
    %365 = vector.broadcast %73 : f32 to vector<8x128xf32>
    %366 = arith.mulf %176, %365 : vector<8x128xf32>
    %367 = arith.addf %364, %366 : vector<8x128xf32>
    %368 = vector.broadcast %74 : f32 to vector<8x128xf32>
    %369 = arith.mulf %191, %368 : vector<8x128xf32>
    %370 = arith.addf %367, %369 : vector<8x128xf32>
    %371 = vector.broadcast %75 : f32 to vector<8x128xf32>
    %372 = arith.mulf %206, %371 : vector<8x128xf32>
    %373 = arith.addf %370, %372 : vector<8x128xf32>
    %374 = vector.broadcast %76 : f32 to vector<8x128xf32>
    %375 = arith.mulf %221, %374 : vector<8x128xf32>
    %376 = arith.addf %373, %375 : vector<8x128xf32>
    %377 = vector.broadcast %89 : f32 to vector<8x128xf32>
    %378 = arith.addf %376, %377 : vector<8x128xf32>
    %cst_17 = arith.constant 0.000000e+00 : f32
    %379 = vector.broadcast %cst_17 : f32 to vector<8x128xf32>
    %380 = arith.cmpf oge, %378, %379 : vector<8x128xf32>
    %381 = vector.broadcast %96 : f32 to vector<8x128xf32>
    %382 = arith.mulf %381, %378 : vector<8x128xf32>
    %383 = arith.select %380, %378, %382 : vector<8x128xi1>, vector<8x128xf32>
    %384 = vector.broadcast %77 : f32 to vector<8x128xf32>
    %385 = arith.mulf %131, %384 : vector<8x128xf32>
    %386 = vector.broadcast %78 : f32 to vector<8x128xf32>
    %387 = arith.mulf %146, %386 : vector<8x128xf32>
    %388 = arith.addf %385, %387 : vector<8x128xf32>
    %389 = vector.broadcast %79 : f32 to vector<8x128xf32>
    %390 = arith.mulf %161, %389 : vector<8x128xf32>
    %391 = arith.addf %388, %390 : vector<8x128xf32>
    %392 = vector.broadcast %80 : f32 to vector<8x128xf32>
    %393 = arith.mulf %176, %392 : vector<8x128xf32>
    %394 = arith.addf %391, %393 : vector<8x128xf32>
    %395 = vector.broadcast %81 : f32 to vector<8x128xf32>
    %396 = arith.mulf %191, %395 : vector<8x128xf32>
    %397 = arith.addf %394, %396 : vector<8x128xf32>
    %398 = vector.broadcast %82 : f32 to vector<8x128xf32>
    %399 = arith.mulf %206, %398 : vector<8x128xf32>
    %400 = arith.addf %397, %399 : vector<8x128xf32>
    %401 = vector.broadcast %83 : f32 to vector<8x128xf32>
    %402 = arith.mulf %221, %401 : vector<8x128xf32>
    %403 = arith.addf %400, %402 : vector<8x128xf32>
    %404 = vector.broadcast %90 : f32 to vector<8x128xf32>
    %405 = arith.addf %403, %404 : vector<8x128xf32>
    %cst_18 = arith.constant 0.000000e+00 : f32
    %406 = vector.broadcast %cst_18 : f32 to vector<8x128xf32>
    %407 = arith.cmpf oge, %405, %406 : vector<8x128xf32>
    %408 = vector.broadcast %97 : f32 to vector<8x128xf32>
    %409 = arith.mulf %408, %405 : vector<8x128xf32>
    %410 = arith.select %407, %405, %409 : vector<8x128xi1>, vector<8x128xf32>
    %411 = vector.broadcast %98 : f32 to vector<8x128xf32>
    %412 = arith.mulf %248, %411 : vector<8x128xf32>
    %413 = vector.broadcast %99 : f32 to vector<8x128xf32>
    %414 = arith.mulf %275, %413 : vector<8x128xf32>
    %415 = arith.addf %412, %414 : vector<8x128xf32>
    %416 = vector.broadcast %100 : f32 to vector<8x128xf32>
    %417 = arith.mulf %302, %416 : vector<8x128xf32>
    %418 = arith.addf %415, %417 : vector<8x128xf32>
    %419 = vector.broadcast %101 : f32 to vector<8x128xf32>
    %420 = arith.mulf %329, %419 : vector<8x128xf32>
    %421 = arith.addf %418, %420 : vector<8x128xf32>
    %422 = vector.broadcast %102 : f32 to vector<8x128xf32>
    %423 = arith.mulf %356, %422 : vector<8x128xf32>
    %424 = arith.addf %421, %423 : vector<8x128xf32>
    %425 = vector.broadcast %103 : f32 to vector<8x128xf32>
    %426 = arith.mulf %383, %425 : vector<8x128xf32>
    %427 = arith.addf %424, %426 : vector<8x128xf32>
    %428 = vector.broadcast %104 : f32 to vector<8x128xf32>
    %429 = arith.mulf %410, %428 : vector<8x128xf32>
    %430 = arith.addf %427, %429 : vector<8x128xf32>
    %431 = vector.broadcast %105 : f32 to vector<8x128xf32>
    %432 = arith.addf %430, %431 : vector<8x128xf32>
    %433 = math.tanh %432 : vector<8x128xf32>
    %cst_19 = arith.constant 5.000000e-01 : f32
    %434 = vector.broadcast %cst_19 : f32 to vector<8x128xf32>
    %435 = arith.mulf %434, %433 : vector<8x128xf32>
    %cst_20 = arith.constant 5.000000e-01 : f32
    %436 = vector.broadcast %cst_20 : f32 to vector<8x128xf32>
    %437 = arith.addf %435, %436 : vector<8x128xf32>
    %438 = arith.index_cast %107 : i32 to index
    %c0_21 = arith.constant 0 : index
    %439 = vector.load %arg3[%438, %c0_21] : memref<8x128xf32, #tpu.memory_space<vmem>>, vector<8x128xf32>
    tpu.vector_store %arg3[%438, %c0_21], %437 {strides = array<i32>} : memref<8x128xf32, #tpu.memory_space<vmem>>, vector<8x128xf32>,
    %c1_i32 = arith.constant 1 : i32
    return
  }
  func.func @transform_0(%arg0: i32) -> i32 {
    %c0_i32 = arith.constant 0 : i32
    %c0_i32_0 = arith.constant 0 : i32
    return %c0_i32 : i32
  }
  func.func @transform_1(%arg0: i32) -> (i32, i32, i32) {
    %c0_i32 = arith.constant 0 : i32
    %c0_i32_0 = arith.constant 0 : i32
    %c0_i32_1 = arith.constant 0 : i32
    return %c0_i32, %arg0, %c0_i32_0 : i32, i32, i32
  }
  func.func @transform_2(%arg0: i32) -> (i32, i32) {
    %c0_i32 = arith.constant 0 : i32
    %c0_i32_0 = arith.constant 0 : i32
    return %arg0, %c0_i32 : i32, i32
  }
}

</mosaic_0001>

<llo_original>
// kernel: model_t_forward.1
$region0: #{model_t_forward.1}
  #allocation0 [shape = 'u32[]', space=smem, size = 0x4, offset = 0x4, fixed_abs, tag = 'smem constant byte address 0x4 - core index']
  #allocation1 [shape = 'u32[144,128]{1,0:T(1,128)}', space=vmem, size = 0x12000, scoped, tag = 'internal scratch']
  %s0 = inlined_call_operand.vmem [shape: f32[128], index: 0, kind: input, shape index: {}]
  %s1 = inlined_call_operand.vmem [shape: f32[3,8,128], index: 1, kind: input, shape index: {}]
  %s2 = inlined_call_operand.vmem [shape: f32[8,128], index: 2, kind: output, shape index: {}]
  %s3 = sld [smem:[#allocation0]]
  $region22: #{model_t_forward.1} parent=0
    _
  %s5 = ssub.s32 1, %s3
  %s6 = scalar_select 0, %s5, %s3
  $region1: #{model_t_forward.1} parent=0
    #allocation2 [shape = 'u8[512]{0}', space=smem, size = 0x200, scoped, tag = 'input window, operand 0, single buffered']
    #allocation3 [shape = 's32[1]{0}', space=sflag, size = 0x4, scoped, tag = 'scoped memory for model_t_forward.1']
    %7 = vsyncpa [#allocation3], 0
    // Predicated region
    $region2: #{model_t_forward.1} parent=1 // pred_check
      _
    $region3: #{model_t_forward.1} parent=1 // pred_check_branch
      %9 = sbr.rel (0) target = $region5
    $region4: #{model_t_forward.1} parent=1 // pred_region
      %s11 = ssub.s32 16, 16
      %12 = vsyncadd [#allocation3], %s11
      %s14 = sshll.u32 %s0, 4
      %s15 = int_to_ptr.vmem [resolvable:$true] %s14
      %17 = dma.vmem_to_smem %s15, 16, [#allocation2], [#allocation3]
    $region5: #{model_t_forward.1} parent=1 // pred_fallthru
      _
    // Predicated region
    $region6: #{model_t_forward.1} parent=1 // pred_check
      _
    $region7: #{model_t_forward.1} parent=1 // pred_check_branch
      %19 = sbr.rel (0) target = $region9
    $region8: #{model_t_forward.1} parent=1 // pred_region
      _
    $region9: #{model_t_forward.1} parent=1 // pred_fallthru
      _
    // Predicated region
    $region10: #{model_t_forward.1} parent=1 // pred_check
      _
    $region11: #{model_t_forward.1} parent=1 // pred_check_branch
      %21 = sbr.rel (0) target = $region13
    $region12: #{model_t_forward.1} parent=1 // pred_region
      %22 = dma.done [#allocation3], 16
    $region13: #{model_t_forward.1} parent=1 // pred_fallthru
      _
    %23 = sfence
    %s24 = sld [smem:[#allocation2]]
    %s25 = sld [smem:[#allocation2 + $0x1]]
    %s26 = sld [smem:[#allocation2 + $0x2]]
    %s27 = sld [smem:[#allocation2 + $0x3]]
    %s28 = sld [smem:[#allocation2 + $0x4]]
    %s29 = sld [smem:[#allocation2 + $0x5]]
    %s30 = sld [smem:[#allocation2 + $0x6]]
    %s31 = sld [smem:[#allocation2 + $0x7]]
    %s32 = sld [smem:[#allocation2 + $0x8]]
    %s33 = sld [smem:[#allocation2 + $0x9]]
    %s34 = sld [smem:[#allocation2 + $0xa]]
    %s35 = sld [smem:[#allocation2 + $0xb]]
    %s36 = sld [smem:[#allocation2 + $0xc]]
    %s37 = sld [smem:[#allocation2 + $0xd]]
    %s38 = sld [smem:[#allocation2 + $0xe]]
    %s39 = sld [smem:[#allocation2 + $0xf]]
    %s40 = sld [smem:[#allocation2 + $0x10]]
    %s41 = sld [smem:[#allocation2 + $0x11]]
    %s42 = sld [smem:[#allocation2 + $0x12]]
    %s43 = sld [smem:[#allocation2 + $0x13]]
    %s44 = sld [smem:[#allocation2 + $0x14]]
    %s45 = sld [smem:[#allocation2 + $0x15]]
    %s46 = sld [smem:[#allocation2 + $0x16]]
    %s47 = sld [smem:[#allocation2 + $0x17]]
    %s48 = sld [smem:[#allocation2 + $0x18]]
    %s49 = sld [smem:[#allocation2 + $0x19]]
    %s50 = sld [smem:[#allocation2 + $0x1a]]
    %s51 = sld [smem:[#allocation2 + $0x1b]]
    %s52 = sld [smem:[#allocation2 + $0x1c]]
    %s53 = sld [smem:[#allocation2 + $0x1d]]
    %s54 = sld [smem:[#allocation2 + $0x1e]]
    %s55 = sld [smem:[#allocation2 + $0x1f]]
    %s56 = sld [smem:[#allocation2 + $0x20]]
    %s57 = sld [smem:[#allocation2 + $0x21]]
    %s58 = sld [smem:[#allocation2 + $0x22]]
    %s59 = sld [smem:[#allocation2 + $0x23]]
    %s60 = sld [smem:[#allocation2 + $0x24]]
    %s61 = sld [smem:[#allocation2 + $0x25]]
    %s62 = sld [smem:[#allocation2 + $0x26]]
    %s63 = sld [smem:[#allocation2 + $0x27]]
    %s64 = sld [smem:[#allocation2 + $0x28]]
    %s65 = sld [smem:[#allocation2 + $0x29]]
    %s66 = sld [smem:[#allocation2 + $0x2a]]
    %s67 = sld [smem:[#allocation2 + $0x2b]]
    %s68 = sld [smem:[#allocation2 + $0x2c]]
    %s69 = sld [smem:[#allocation2 + $0x2d]]
    %s70 = sld [smem:[#allocation2 + $0x2e]]
    %s71 = sld [smem:[#allocation2 + $0x2f]]
    %s72 = sld [smem:[#allocation2 + $0x30]]
    %s73 = sld [smem:[#allocation2 + $0x31]]
    %s74 = sld [smem:[#allocation2 + $0x32]]
    %s75 = sld [smem:[#allocation2 + $0x33]]
    %s76 = sld [smem:[#allocation2 + $0x34]]
    %s77 = sld [smem:[#allocation2 + $0x35]]
    %s78 = sld [smem:[#allocation2 + $0x36]]
    %s79 = sld [smem:[#allocation2 + $0x37]]
    %s80 = sld [smem:[#allocation2 + $0x38]]
    %s81 = sld [smem:[#allocation2 + $0x39]]
    %s82 = sld [smem:[#allocation2 + $0x3a]]
    %s83 = sld [smem:[#allocation2 + $0x3b]]
    %s84 = sld [smem:[#allocation2 + $0x3c]]
    %s85 = sld [smem:[#allocation2 + $0x3d]]
    %s86 = sld [smem:[#allocation2 + $0x3e]]
    %s87 = sld [smem:[#allocation2 + $0x3f]]
    %s88 = sld [smem:[#allocation2 + $0x40]]
    %s89 = sld [smem:[#allocation2 + $0x41]]
    %s90 = sld [smem:[#allocation2 + $0x42]]
    %s91 = sld [smem:[#allocation2 + $0x43]]
    %s92 = sld [smem:[#allocation2 + $0x44]]
    %s93 = sld [smem:[#allocation2 + $0x45]]
    %s94 = sld [smem:[#allocation2 + $0x46]]
    %s95 = sld [smem:[#allocation2 + $0x47]]
    %s96 = sld [smem:[#allocation2 + $0x48]]
    %s97 = sld [smem:[#allocation2 + $0x49]]
    %s98 = sld [smem:[#allocation2 + $0x4a]]
    %s99 = sld [smem:[#allocation2 + $0x4b]]
    %s100 = sld [smem:[#allocation2 + $0x4c]]
    %s101 = sld [smem:[#allocation2 + $0x4d]]
    %s102 = sld [smem:[#allocation2 + $0x4e]]
    %s103 = sld [smem:[#allocation2 + $0x4f]]
    %s104 = sld [smem:[#allocation2 + $0x50]]
    %s105 = sld [smem:[#allocation2 + $0x51]]
    %s106 = sld [smem:[#allocation2 + $0x52]]
    %s107 = sld [smem:[#allocation2 + $0x53]]
    %s108 = sld [smem:[#allocation2 + $0x54]]
    %s109 = sld [smem:[#allocation2 + $0x55]]
    %s110 = sld [smem:[#allocation2 + $0x56]]
    %s111 = sld [smem:[#allocation2 + $0x57]]
    %s112 = sld [smem:[#allocation2 + $0x58]]
    %s113 = sld [smem:[#allocation2 + $0x59]]
    %s114 = sld [smem:[#allocation2 + $0x5a]]
    %s115 = sld [smem:[#allocation2 + $0x5b]]
    %s116 = sld [smem:[#allocation2 + $0x5c]]
    %s117 = sld [smem:[#allocation2 + $0x5d]]
    %s118 = sld [smem:[#allocation2 + $0x5e]]
    %s119 = sld [smem:[#allocation2 + $0x5f]]
    %s120 = sld [smem:[#allocation2 + $0x60]]
    %s121 = sld [smem:[#allocation2 + $0x61]]
    %s122 = sld [smem:[#allocation2 + $0x62]]
    %s123 = sld [smem:[#allocation2 + $0x63]]
    %s124 = sld [smem:[#allocation2 + $0x64]]
    %s125 = sld [smem:[#allocation2 + $0x65]]
    %s126 = sld [smem:[#allocation2 + $0x66]]
    %s127 = sld [smem:[#allocation2 + $0x67]]
    %s128 = sld [smem:[#allocation2 + $0x68]]
    %s129 = sld [smem:[#allocation2 + $0x69]]
    %v130 = vld [vmem:[%s1] sm:$0xff]
    %s131 = sadd.s32 0, 8
    %s132 = scalar_lea.vmem %s1, %s131
    %v133 = vld [vmem:[%s132] sm:$0xff]
    %s134 = sadd.s32 0, 16
    %s135 = scalar_lea.vmem %s1, %s134
    %v136 = vld [vmem:[%s135] sm:$0xff]
    %v137 = vstv %s24
    %v138 = vmul.f32 %v130, %v137
    %v139 = vstv %s25
    %v140 = vmul.f32 %v133, %v139
    %v141 = vadd.f32 %v138, %v140
    %v142 = vstv %s26
    %v143 = vmul.f32 %v136, %v142
    %v144 = vadd.f32 %v141, %v143
    %v145 = vstv %s45
    %v146 = vadd.f32 %v144, %v145
    %vm147 = vcmp.ge.f32.partialorder %v146, 0.0
    %v148 = vstv %s52
    %v149 = vmul.f32 %v148, %v146
    %v150 = vsel %vm147, %v146, %v149
    %v151 = vstv %s27
    %v152 = vmul.f32 %v130, %v151
    %v153 = vstv %s28
    %v154 = vmul.f32 %v133, %v153
    %v155 = vadd.f32 %v152, %v154
    %v156 = vstv %s29
    %v157 = vmul.f32 %v136, %v156
    %v158 = vadd.f32 %v155, %v157
    %v159 = vstv %s46
    %v160 = vadd.f32 %v158, %v159
    %vm161 = vcmp.ge.f32.partialorder %v160, 0.0
    %v162 = vstv %s53
    %v163 = vmul.f32 %v162, %v160
    %v164 = vsel %vm161, %v160, %v163
    %v165 = vstv %s30
    %v166 = vmul.f32 %v130, %v165
    %v167 = vstv %s31
    %v168 = vmul.f32 %v133, %v167
    %v169 = vadd.f32 %v166, %v168
    %v170 = vstv %s32
    %v171 = vmul.f32 %v136, %v170
    %v172 = vadd.f32 %v169, %v171
    %v173 = vstv %s47
    %v174 = vadd.f32 %v172, %v173
    %vm175 = vcmp.ge.f32.partialorder %v174, 0.0
    %v176 = vstv %s54
    %v177 = vmul.f32 %v176, %v174
    %v178 = vsel %vm175, %v174, %v177
    %v179 = vstv %s33
    %v180 = vmul.f32 %v130, %v179
    %v181 = vstv %s34
    %v182 = vmul.f32 %v133, %v181
    %v183 = vadd.f32 %v180, %v182
    %v184 = vstv %s35
    %v185 = vmul.f32 %v136, %v184
    %v186 = vadd.f32 %v183, %v185
    %v187 = vstv %s48
    %v188 = vadd.f32 %v186, %v187
    %vm189 = vcmp.ge.f32.partialorder %v188, 0.0
    %v190 = vstv %s55
    %v191 = vmul.f32 %v190, %v188
    %v192 = vsel %vm189, %v188, %v191
    %v193 = vstv %s36
    %v194 = vmul.f32 %v130, %v193
    %v195 = vstv %s37
    %v196 = vmul.f32 %v133, %v195
    %v197 = vadd.f32 %v194, %v196
    %v198 = vstv %s38
    %v199 = vmul.f32 %v136, %v198
    %v200 = vadd.f32 %v197, %v199
    %v201 = vstv %s49
    %v202 = vadd.f32 %v200, %v201
    %vm203 = vcmp.ge.f32.partialorder %v202, 0.0
    %v204 = vstv %s56
    %v205 = vmul.f32 %v204, %v202
    %v206 = vsel %vm203, %v202, %v205
    %v207 = vstv %s39
    %v208 = vmul.f32 %v130, %v207
    %v209 = vstv %s40
    %v210 = vmul.f32 %v133, %v209
    %v211 = vadd.f32 %v208, %v210
    %v212 = vstv %s41
    %v213 = vmul.f32 %v136, %v212
    %v214 = vadd.f32 %v211, %v213
    %v215 = vstv %s50
    %v216 = vadd.f32 %v214, %v215
    %vm217 = vcmp.ge.f32.partialorder %v216, 0.0
    %v218 = vstv %s57
    %v219 = vmul.f32 %v218, %v216
    %v220 = vsel %vm217, %v216, %v219
    %v221 = vstv %s42
    %v222 = vmul.f32 %v130, %v221
    %v223 = vstv %s43
    %v224 = vmul.f32 %v133, %v223
    %v225 = vadd.f32 %v222, %v224
    %v226 = vstv %s44
    %v227 = vmul.f32 %v136, %v226
    %v228 = vadd.f32 %v225, %v227
    %v229 = vstv %s51
    %v230 = vadd.f32 %v228, %v229
    %vm231 = vcmp.ge.f32.partialorder %v230, 0.0
    %v232 = vstv %s58
    %v233 = vmul.f32 %v232, %v230
    %v234 = vsel %vm231, %v230, %v233
    %v235 = vstv %s59
    %v236 = vmul.f32 %v150, %v235
    %v237 = vstv %s60
    %v238 = vmul.f32 %v164, %v237
    %v239 = vadd.f32 %v236, %v238
    %v240 = vstv %s61
    %v241 = vmul.f32 %v178, %v240
    %v242 = vadd.f32 %v239, %v241
    %v243 = vstv %s62
    %v244 = vmul.f32 %v192, %v243
    %v245 = vadd.f32 %v242, %v244
    %v246 = vstv %s63
    %v247 = vmul.f32 %v206, %v246
    %v248 = vadd.f32 %v245, %v247
    %v249 = vstv %s64
    %v250 = vmul.f32 %v220, %v249
    %v251 = vadd.f32 %v248, %v250
    %v252 = vstv %s65
    %v253 = vmul.f32 %v234, %v252
    %v254 = vadd.f32 %v251, %v253
    %v255 = vstv %s108
    %v256 = vadd.f32 %v254, %v255
    %vm257 = vcmp.ge.f32.partialorder %v256, 0.0
    %v258 = vstv %s115
    %v259 = vmul.f32 %v258, %v256
    %v260 = vsel %vm257, %v256, %v259
    %v261 = vstv %s66
    %v262 = vmul.f32 %v150, %v261
    %v263 = vstv %s67
    %v264 = vmul.f32 %v164, %v263
    %v265 = vadd.f32 %v262, %v264
    %v266 = vstv %s68
    %v267 = vmul.f32 %v178, %v266
    %v268 = vadd.f32 %v265, %v267
    %v269 = vstv %s69
    %v270 = vmul.f32 %v192, %v269
    %v271 = vadd.f32 %v268, %v270
    %v272 = vstv %s70
    %v273 = vmul.f32 %v206, %v272
    %v274 = vadd.f32 %v271, %v273
    %v275 = vstv %s71
    %v276 = vmul.f32 %v220, %v275
    %v277 = vadd.f32 %v274, %v276
    %v278 = vstv %s72
    %v279 = vmul.f32 %v234, %v278
    %v280 = vadd.f32 %v277, %v279
    %v281 = vstv %s109
    %v282 = vadd.f32 %v280, %v281
    %vm283 = vcmp.ge.f32.partialorder %v282, 0.0
    %v284 = vstv %s116
    %v285 = vmul.f32 %v284, %v282
    %v286 = vsel %vm283, %v282, %v285
    %v287 = vstv %s73
    %v288 = vmul.f32 %v150, %v287
    %v289 = vstv %s74
    %v290 = vmul.f32 %v164, %v289
    %v291 = vadd.f32 %v288, %v290
    %v292 = vstv %s75
    %v293 = vmul.f32 %v178, %v292
    %v294 = vadd.f32 %v291, %v293
    %v295 = vstv %s76
    %v296 = vmul.f32 %v192, %v295
    %v297 = vadd.f32 %v294, %v296
    %v298 = vstv %s77
    %v299 = vmul.f32 %v206, %v298
    %v300 = vadd.f32 %v297, %v299
    %v301 = vstv %s78
    %v302 = vmul.f32 %v220, %v301
    %v303 = vadd.f32 %v300, %v302
    %v304 = vstv %s79
    %v305 = vmul.f32 %v234, %v304
    %v306 = vadd.f32 %v303, %v305
    %v307 = vstv %s110
    %v308 = vadd.f32 %v306, %v307
    %vm309 = vcmp.ge.f32.partialorder %v308, 0.0
    %v310 = vstv %s117
    %v311 = vmul.f32 %v310, %v308
    %v312 = vsel %vm309, %v308, %v311
    %v313 = vstv %s80
    %v314 = vmul.f32 %v150, %v313
    %v315 = vstv %s81
    %v316 = vmul.f32 %v164, %v315
    %v317 = vadd.f32 %v314, %v316
    %v318 = vstv %s82
    %v319 = vmul.f32 %v178, %v318
    %v320 = vadd.f32 %v317, %v319
    %v321 = vstv %s83
    %v322 = vmul.f32 %v192, %v321
    %v323 = vadd.f32 %v320, %v322
    %v324 = vstv %s84
    %v325 = vmul.f32 %v206, %v324
    %v326 = vadd.f32 %v323, %v325
    %v327 = vstv %s85
    %v328 = vmul.f32 %v220, %v327
    %v329 = vadd.f32 %v326, %v328
    %v330 = vstv %s86
    %v331 = vmul.f32 %v234, %v330
    %v332 = vadd.f32 %v329, %v331
    %v333 = vstv %s111
    %v334 = vadd.f32 %v332, %v333
    %vm335 = vcmp.ge.f32.partialorder %v334, 0.0
    %v336 = vstv %s118
    %v337 = vmul.f32 %v336, %v334
    %v338 = vsel %vm335, %v334, %v337
    %v339 = vstv %s87
    %v340 = vmul.f32 %v150, %v339
    %v341 = vstv %s88
    %v342 = vmul.f32 %v164, %v341
    %v343 = vadd.f32 %v340, %v342
    %v344 = vstv %s89
    %v345 = vmul.f32 %v178, %v344
    %v346 = vadd.f32 %v343, %v345
    %v347 = vstv %s90
    %v348 = vmul.f32 %v192, %v347
    %v349 = vadd.f32 %v346, %v348
    %v350 = vstv %s91
    %v351 = vmul.f32 %v206, %v350
    %v352 = vadd.f32 %v349, %v351
    %v353 = vstv %s92
    %v354 = vmul.f32 %v220, %v353
    %v355 = vadd.f32 %v352, %v354
    %v356 = vstv %s93
    %v357 = vmul.f32 %v234, %v356
    %v358 = vadd.f32 %v355, %v357
    %v359 = vstv %s112
    %v360 = vadd.f32 %v358, %v359
    %vm361 = vcmp.ge.f32.partialorder %v360, 0.0
    %v362 = vstv %s119
    %v363 = vmul.f32 %v362, %v360
    %v364 = vsel %vm361, %v360, %v363
    %v365 = vstv %s94
    %v366 = vmul.f32 %v150, %v365
    %v367 = vstv %s95
    %v368 = vmul.f32 %v164, %v367
    %v369 = vadd.f32 %v366, %v368
    %v370 = vstv %s96
    %v371 = vmul.f32 %v178, %v370
    %v372 = vadd.f32 %v369, %v371
    %v373 = vstv %s97
    %v374 = vmul.f32 %v192, %v373
    %v375 = vadd.f32 %v372, %v374
    %v376 = vstv %s98
    %v377 = vmul.f32 %v206, %v376
    %v378 = vadd.f32 %v375, %v377
    %v379 = vstv %s99
    %v380 = vmul.f32 %v220, %v379
    %v381 = vadd.f32 %v378, %v380
    %v382 = vstv %s100
    %v383 = vmul.f32 %v234, %v382
    %v384 = vadd.f32 %v381, %v383
    %v385 = vstv %s113
    %v386 = vadd.f32 %v384, %v385
    %vm387 = vcmp.ge.f32.partialorder %v386, 0.0
    %v388 = vstv %s120
    %v389 = vmul.f32 %v388, %v386
    %v390 = vsel %vm387, %v386, %v389
    %v391 = vstv %s101
    %v392 = vmul.f32 %v150, %v391
    %v393 = vstv %s102
    %v394 = vmul.f32 %v164, %v393
    %v395 = vadd.f32 %v392, %v394
    %v396 = vstv %s103
    %v397 = vmul.f32 %v178, %v396
    %v398 = vadd.f32 %v395, %v397
    %v399 = vstv %s104
    %v400 = vmul.f32 %v192, %v399
    %v401 = vadd.f32 %v398, %v400
    %v402 = vstv %s105
    %v403 = vmul.f32 %v206, %v402
    %v404 = vadd.f32 %v401, %v403
    %v405 = vstv %s106
    %v406 = vmul.f32 %v220, %v405
    %v407 = vadd.f32 %v404, %v406
    %v408 = vstv %s107
    %v409 = vmul.f32 %v234, %v408
    %v410 = vadd.f32 %v407, %v409
    %v411 = vstv %s114
    %v412 = vadd.f32 %v410, %v411
    %vm413 = vcmp.ge.f32.partialorder %v412, 0.0
    %v414 = vstv %s121
    %v415 = vmul.f32 %v414, %v412
    %v416 = vsel %vm413, %v412, %v415
    %v417 = vstv %s122
    %v418 = vmul.f32 %v260, %v417
    %v419 = vstv %s123
    %v420 = vmul.f32 %v286, %v419
    %v421 = vadd.f32 %v418, %v420
    %v422 = vstv %s124
    %v423 = vmul.f32 %v312, %v422
    %v424 = vadd.f32 %v421, %v423
    %v425 = vstv %s125
    %v426 = vmul.f32 %v338, %v425
    %v427 = vadd.f32 %v424, %v426
    %v428 = vstv %s126
    %v429 = vmul.f32 %v364, %v428
    %v430 = vadd.f32 %v427, %v429
    %v431 = vstv %s127
    %v432 = vmul.f32 %v390, %v431
    %v433 = vadd.f32 %v430, %v432
    %v434 = vstv %s128
    %v435 = vmul.f32 %v416, %v434
    %v436 = vadd.f32 %v433, %v435
    %v437 = vstv %s129
    %v438 = vadd.f32 %v436, %v437
    %v439 = vtanh.pop %v438
    %v440 = vmul.f32 %v439, 0.5
    %v441 = vadd.f32 %v440, 0.5
    %442 = vst [vmem:[%s2] sm:$0xff] %v441
    // Predicated region
    $region14: #{model_t_forward.1} parent=1 // pred_check
      _
    $region15: #{model_t_forward.1} parent=1 // pred_check_branch
      %444 = sbr.rel (0) target = $region17
    $region16: #{model_t_forward.1} parent=1 // pred_region
      _
    $region17: #{model_t_forward.1} parent=1 // pred_fallthru
      _
    // Predicated region
    $region18: #{model_t_forward.1} parent=1 // pred_check
      _
    $region19: #{model_t_forward.1} parent=1 // pred_check_branch
      %446 = sbr.rel (0) target = $region21
    $region20: #{model_t_forward.1} parent=1 // pred_region
      _
    $region21: #{model_t_forward.1} parent=1 // pred_fallthru
      _
    %447 = vsyncpa [#allocation3], 1

</llo_original>
